<compile_context>
chip_gen: v7x
topology: tpu7x:2x2x1
jax: 0.10.0
libtpu: 0.0.40
codegen_flags: <defaults>
</compile_context>

<pallas_src>
import functools

import jax
import jax.numpy as jnp
from jax.experimental import pallas as pl
from jax.experimental.pallas import tpu as pltpu


def _round_up(x: int, m: int) -> int:
    return ((x + m - 1) // m) * m


def _mlp_kernel(x_ref, wgu_ref, wd_ref, o_ref, acc_ref):
    """Fused gated-MLP step for one (token tile, I chunk).

    x_ref  : (tm, Hp)       token tile
    wgu_ref: (Hp, 2*tI)     [gate_chunk | up_chunk] fused weight block
    wd_ref : (tI, Hp)       down_proj chunk
    o_ref  : (tm, Hp)       output tile (written on last I chunk)
    acc_ref: (tm, Hp) f32   VMEM accumulator, resident across the I axis
    """
    j = pl.program_id(1)

    @pl.when(j == 0)
    def _():
        acc_ref[...] = jnp.zeros_like(acc_ref)

    x = x_ref[...]
    # One MXU pass produces both gate and up projections for this I chunk.
    gu = jnp.dot(x, wgu_ref[...], preferred_element_type=jnp.float32)  # (tm, 2*tI)
    t_i = wd_ref.shape[0]
    gate = gu[:, :t_i]
    up = gu[:, t_i:]

    # SiLU(gate) * up in f32 on the VPU/EUP (v5e has no bf16 elementwise path).
    h = gate * jax.nn.sigmoid(gate) * up

    # Accumulate the partial down-projection (h is cast to the MXU operand dtype;
    # accumulation stays f32).
    acc_ref[...] += jnp.dot(h.astype(wd_ref.dtype), wd_ref[...],
                            preferred_element_type=jnp.float32)

    @pl.when(j == pl.num_programs(1) - 1)
    def _():
        o_ref[...] = acc_ref[...].astype(o_ref.dtype)


@functools.partial(jax.jit, static_argnames=("token_tile", "i_tile", "compute_dtype"))
def mlp_pallas(hidden_state, w_gate, w_up, w_down, *,
               token_tile=None, i_tile=None, compute_dtype=None):
    """hidden_state: [B, S, H]; weights already transposed to [in, out]."""
    B, S, H = hidden_state.shape
    I = w_gate.shape[1]
    T = B * S
    out_dtype = hidden_state.dtype
    cdtype = out_dtype if compute_dtype is None else compute_dtype

    # Lane-dense padding: every last dim presented to the kernel is a multiple of 128.
    H_pad = _round_up(H, 128)

    # Token tile: target 256-512 so the token grid pipelines x-in / out-writeback DMA;
    # multiple of 16 sublanes covers both f32 and bf16 packing.
    if token_tile is None:
        token_tile = min(512, _round_up(T, 16))
    T_pad = _round_up(T, token_tile)

    # Intermediate tile: multiple of 128 lanes; keeps per-step weight blocks
    # (double-buffered) well inside v7x's 64 MiB VMEM even for real ViT shapes.
    if i_tile is None:
        i_tile = min(1024, _round_up(I, 128))
    I_pad = _round_up(I, i_tile)
    nI = I_pad // i_tile
    n_tok = T_pad // token_tile

    # Zero-pad (done once in the wrapper, not per grid step). Zero padding is exact:
    # padded I columns give SiLU(0)*0 = 0, padded H columns of the output are sliced off.
    x2d = hidden_state.reshape(T, H)
    x2d = jnp.pad(x2d, ((0, T_pad - T), (0, H_pad - H))).astype(cdtype)
    wg = jnp.pad(w_gate, ((0, H_pad - H), (0, I_pad - I)))
    wu = jnp.pad(w_up, ((0, H_pad - H), (0, I_pad - I)))
    wd = jnp.pad(w_down, ((0, I_pad - I), (0, H_pad - H))).astype(cdtype)

    # Fuse gate/up weights per I chunk: block j of wgu is [wg[:, chunk j] | wu[:, chunk j]],
    # so one DMA + one contiguous MXU RHS per grid step feeds both projections.
    wgu = jnp.concatenate(
        [wg.reshape(H_pad, nI, i_tile), wu.reshape(H_pad, nI, i_tile)], axis=-1
    ).reshape(H_pad, nI * 2 * i_tile).astype(cdtype)

    # Explicit VMEM budget: 2x for double buffering of each pipelined block + accumulator.
    bytes_c = jnp.dtype(cdtype).itemsize
    vmem_est = (2 * (token_tile * H_pad            # x tile
                     + H_pad * 2 * i_tile          # fused gate/up weight block
                     + i_tile * H_pad              # down-proj block
                     + token_tile * H_pad)         # output tile
                * bytes_c
                + token_tile * H_pad * 4)          # f32 accumulator
    vmem_limit = int(min(max(2 * vmem_est, 8 << 20), 48 << 20))

    out2d = pl.pallas_call(
        _mlp_kernel,
        out_shape=jax.ShapeDtypeStruct((T_pad, H_pad), out_dtype),
        grid_spec=pltpu.PrefetchScalarGridSpec(
            num_scalar_prefetch=0,
            grid=(n_tok, nI),
            in_specs=[
                pl.BlockSpec((token_tile, H_pad), lambda i, j: (i, 0)),   # x tile
                pl.BlockSpec((H_pad, 2 * i_tile), lambda i, j: (0, j)),   # [gate|up] chunk
                pl.BlockSpec((i_tile, H_pad), lambda i, j: (j, 0)),       # down chunk
            ],
            out_specs=pl.BlockSpec((token_tile, H_pad), lambda i, j: (i, 0)),
            scratch_shapes=[pltpu.VMEM((token_tile, H_pad), jnp.float32)],
        ),
        compiler_params=pltpu.CompilerParams(
            dimension_semantics=("parallel", "arbitrary"),
            vmem_limit_bytes=vmem_limit,
        ),
    )(x2d, wgu, wd)

    return out2d[:T, :H].reshape(B, S, H)


def mlp_reference(hidden_state, w_gate, w_up, w_down):
    gate = jax.nn.silu(hidden_state @ w_gate)
    up = hidden_state @ w_up
    return (gate * up) @ w_down


def _make_params(key, hidden_size, intermediate_size, dtype=jnp.float32):
    kg, ku, kd = jax.random.split(key, 3)
    bound_h = 1.0 / (hidden_size ** 0.5)
    bound_i = 1.0 / (intermediate_size ** 0.5)
    w_gate = jax.random.uniform(kg, (hidden_size, intermediate_size), dtype, -bound_h, bound_h)
    w_up = jax.random.uniform(ku, (hidden_size, intermediate_size), dtype, -bound_h, bound_h)
    w_down = jax.random.uniform(kd, (intermediate_size, hidden_size), dtype, -bound_i, bound_i)
    return w_gate, w_up, w_down


if __name__ == "__main__":
    key = jax.random.PRNGKey(0)
    k1, k2, k3, k4 = jax.random.split(key, 4)

    # --- Test 1: small shapes consistent with the ViT FFN module (grid collapses to 1x1). ---
    batch, seq, hidden_size, intermediate_size = 2, 8, 32, 64
    w_gate, w_up, w_down = _make_params(k1, hidden_size, intermediate_size)
    x = jax.random.normal(k2, (batch, seq, hidden_size), jnp.float32)

    out = jax.block_until_ready(mlp_pallas(x, w_gate, w_up, w_down))
    ref = mlp_reference(x, w_gate, w_up, w_down)
    assert out.shape == (batch, seq, hidden_size)
    assert jnp.allclose(out, ref, atol=1e-5, rtol=1e-5), "small-shape mismatch vs. reference"

    # --- Test 2: multi-step grid on both axes (exercises pipelining + I accumulator). ---
    batch2, seq2, hidden2, inter2 = 2, 128, 256, 512
    w_gate2, w_up2, w_down2 = _make_params(k3, hidden2, inter2)
    x2 = jax.random.normal(k4, (batch2, seq2, hidden2), jnp.float32)

    out2 = jax.block_until_ready(
        mlp_pallas(x2, w_gate2, w_up2, w_down2, token_tile=128, i_tile=128))
    ref2 = mlp_reference(x2, w_gate2, w_up2, w_down2)
    assert jnp.allclose(out2, ref2, atol=1e-4, rtol=1e-4), "tiled-grid mismatch vs. reference"

    # --- Test 3: bf16 operands on the MXU (f32 accumulation), loose tolerance. ---
    out3 = jax.block_until_ready(
        mlp_pallas(x2, w_gate2, w_up2, w_down2, token_tile=128, i_tile=128,
                   compute_dtype=jnp.bfloat16))
    assert jnp.allclose(out3, ref2, atol=5e-2, rtol=5e-2), "bf16 path mismatch vs. reference"

    print("KERNEL_OK")
</pallas_src>

<mosaic_0001>
module attributes {stable_mosaic.version = 11 : i64} {
  func.func @_mlp_kernel(%arg0: i32, %arg1: i32, %arg2: memref<16x128xf32, #tpu.memory_space<vmem>>, %arg3: memref<128x256xf32, #tpu.memory_space<vmem>>, %arg4: memref<128x128xf32, #tpu.memory_space<vmem>>, %arg5: memref<16x128xf32, #tpu.memory_space<vmem>>, %arg6: memref<16x128xf32, #tpu.memory_space<vmem>>) attributes {dimension_semantics = [#tpu.dimension_semantics<parallel>, #tpu.dimension_semantics<arbitrary>], iteration_bounds = array<i64: 1, 1>, scalar_prefetch = 0 : i64, scratch_operands = 1 : i64, tpu.core_type = #tpu.core_type<tc>, window_params = [{transform_indices = @transform_0, window_bounds = array<i64: 16, 128>}, {transform_indices = @transform_1, window_bounds = array<i64: 128, 256>}, {transform_indices = @transform_2, window_bounds = array<i64: 128, 128>}, {transform_indices = @transform_3, window_bounds = array<i64: 16, 128>}]} {
    %c0_i32 = arith.constant 0 : i32
    %0 = arith.cmpi eq, %arg1, %c0_i32 : i32
    %1 = arith.extui %0 : i1 to i32
    %c0_i32_0 = arith.constant 0 : i32
    %2 = arith.cmpi ne, %1, %c0_i32_0 : i32
    scf.if %2 {
      %cst_14 = arith.constant 0.000000e+00 : f32
      %23 = vector.broadcast %cst_14 : f32 to vector<16x128xf32>
      %c0_15 = arith.constant 0 : index
      %c0_16 = arith.constant 0 : index
      %24 = vector.load %arg6[%c0_15, %c0_16] : memref<16x128xf32, #tpu.memory_space<vmem>>, vector<16x128xf32>
      tpu.vector_store %arg6[%c0_15, %c0_16], %23 {strides = array<i32>} : memref<16x128xf32, #tpu.memory_space<vmem>>, vector<16x128xf32>,
    } else {
    }
    %c0 = arith.constant 0 : index
    %c0_1 = arith.constant 0 : index
    %3 = vector.load %arg2[%c0, %c0_1] : memref<16x128xf32, #tpu.memory_space<vmem>>, vector<16x128xf32>
    %c0_2 = arith.constant 0 : index
    %c0_3 = arith.constant 0 : index
    %4 = vector.load %arg3[%c0_2, %c0_3] : memref<128x256xf32, #tpu.memory_space<vmem>>, vector<128x256xf32>
    %cst = arith.constant dense<0.000000e+00> : vector<16x256xf32>
    %5 = tpu.matmul %3, %4, %cst {dimension_numbers = #tpu.dot_dimension_numbers<[1], [0], [0], [1], [0, 0, 1, 1], [], []>} : vector<16x128xf32>, vector<128x256xf32>, vector<16x256xf32> -> vector<16x256xf32>
    %6 = vector.extract_strided_slice %5 {offsets = [0, 0], sizes = [16, 128], strides = [1, 1]} : vector<16x256xf32> to vector<16x128xf32>
    %7 = vector.extract_strided_slice %5 {offsets = [0, 128], sizes = [16, 128], strides = [1, 1]} : vector<16x256xf32> to vector<16x128xf32>
    %8 = arith.negf %6 : vector<16x128xf32>
    %9 = math.exp %8 : vector<16x128xf32>
    %cst_4 = arith.constant 1.000000e+00 : f32
    %10 = vector.broadcast %cst_4 : f32 to vector<16x128xf32>
    %11 = arith.addf %10, %9 : vector<16x128xf32>
    %12 = arith.divf %10, %11 : vector<16x128xf32>
    %13 = arith.mulf %6, %12 : vector<16x128xf32>
    %14 = arith.mulf %13, %7 : vector<16x128xf32>
    %c0_5 = arith.constant 0 : index
    %c0_6 = arith.constant 0 : index
    %15 = vector.load %arg6[%c0_5, %c0_6] : memref<16x128xf32, #tpu.memory_space<vmem>>, vector<16x128xf32>
    %c0_7 = arith.constant 0 : index
    %c0_8 = arith.constant 0 : index
    %16 = vector.load %arg4[%c0_7, %c0_8] : memref<128x128xf32, #tpu.memory_space<vmem>>, vector<128x128xf32>
    %cst_9 = arith.constant dense<0.000000e+00> : vector<16x128xf32>
    %17 = tpu.matmul %14, %16, %cst_9 {dimension_numbers = #tpu.dot_dimension_numbers<[1], [0], [0], [1], [0, 0, 1, 1], [], []>} : vector<16x128xf32>, vector<128x128xf32>, vector<16x128xf32> -> vector<16x128xf32>
    %18 = arith.addf %15, %17 : vector<16x128xf32>
    %c0_10 = arith.constant 0 : index
    %c0_11 = arith.constant 0 : index
    %19 = vector.load %arg6[%c0_10, %c0_11] : memref<16x128xf32, #tpu.memory_space<vmem>>, vector<16x128xf32>
    tpu.vector_store %arg6[%c0_10, %c0_11], %18 {strides = array<i32>} : memref<16x128xf32, #tpu.memory_space<vmem>>, vector<16x128xf32>,
    %c0_i32_12 = arith.constant 0 : i32
    %20 = arith.cmpi eq, %arg1, %c0_i32_12 : i32
    %21 = arith.extui %20 : i1 to i32
    %c0_i32_13 = arith.constant 0 : i32
    %22 = arith.cmpi ne, %21, %c0_i32_13 : i32
    scf.if %22 {
      %c0_14 = arith.constant 0 : index
      %c0_15 = arith.constant 0 : index
      %23 = vector.load %arg6[%c0_14, %c0_15] : memref<16x128xf32, #tpu.memory_space<vmem>>, vector<16x128xf32>
      %c0_16 = arith.constant 0 : index
      %c0_17 = arith.constant 0 : index
      %24 = vector.load %arg5[%c0_16, %c0_17] : memref<16x128xf32, #tpu.memory_space<vmem>>, vector<16x128xf32>
      tpu.vector_store %arg5[%c0_16, %c0_17], %23 {strides = array<i32>} : memref<16x128xf32, #tpu.memory_space<vmem>>, vector<16x128xf32>,
    } else {
    }
    return
  }
  func.func @transform_0(%arg0: i32, %arg1: i32) -> (i32, i32) {
    %c0_i32 = arith.constant 0 : i32
    %c0_i32_0 = arith.constant 0 : i32
    return %arg0, %c0_i32 : i32, i32
  }
  func.func @transform_1(%arg0: i32, %arg1: i32) -> (i32, i32) {
    %c0_i32 = arith.constant 0 : i32
    %c0_i32_0 = arith.constant 0 : i32
    return %c0_i32, %arg1 : i32, i32
  }
  func.func @transform_2(%arg0: i32, %arg1: i32) -> (i32, i32) {
    %c0_i32 = arith.constant 0 : i32
    %c0_i32_0 = arith.constant 0 : i32
    return %arg1, %c0_i32 : i32, i32
  }
  func.func @transform_3(%arg0: i32, %arg1: i32) -> (i32, i32) {
    %c0_i32 = arith.constant 0 : i32
    %c0_i32_0 = arith.constant 0 : i32
    return %arg0, %c0_i32 : i32, i32
  }
}

</mosaic_0001>

<llo_original>
// kernel: mlp_pallas.1
$region0: #{mlp_pallas.1}
  #allocation0 [shape = 'u32[]', space=smem, size = 0x4, offset = 0x4, fixed_abs, tag = 'smem constant byte address 0x4 - core index']
  #allocation1 [shape = 'u32[144,128]{1,0:T(1,128)}', space=vmem, size = 0x12000, scoped, tag = 'internal scratch']
  #allocation2 [shape = 'f32[16,128]{1,0:T(8,128)}', space=vmem, size = 0x2000, scoped, tag = 'scratch operand']
  %s0 = inlined_call_operand.vmem [shape: f32[16,128], index: 0, kind: input, shape index: {}]
  %s1 = inlined_call_operand.vmem [shape: f32[128,256], index: 1, kind: input, shape index: {}]
  %s2 = inlined_call_operand.vmem [shape: f32[128,128], index: 2, kind: input, shape index: {}]
  %s3 = inlined_call_operand.vmem [shape: f32[16,128], index: 3, kind: output, shape index: {}]
  %s4 = sld [smem:[#allocation0]]
  $region30: #{mlp_pallas.1} parent=0
    _
  %s6 = ssub.s32 1, %s4
  %s7 = scalar_select 0, %s6, %s4
  // Predicated region
  $region2: #{mlp_pallas.1} parent=0 // pred_check
    _
  $region3: #{mlp_pallas.1} parent=0 // pred_check_branch
    %9 = sbr.rel (0) target = $region5
  $region4: #{mlp_pallas.1} parent=0 // pred_region
    _
  $region5: #{mlp_pallas.1} parent=0 // pred_fallthru
    _
  // Predicated region
  $region6: #{mlp_pallas.1} parent=0 // pred_check
    _
  $region7: #{mlp_pallas.1} parent=0 // pred_check_branch
    %11 = sbr.rel (0) target = $region9
  $region8: #{mlp_pallas.1} parent=0 // pred_region
    _
  $region9: #{mlp_pallas.1} parent=0 // pred_fallthru
    _
  // Predicated region
  $region10: #{mlp_pallas.1} parent=0 // pred_check
    _
  $region11: #{mlp_pallas.1} parent=0 // pred_check_branch
    %13 = sbr.rel (0) target = $region13
  $region12: #{mlp_pallas.1} parent=0 // pred_region
    _
  $region13: #{mlp_pallas.1} parent=0 // pred_fallthru
    _
  %p14 = scmp.eq.s32.totalorder 0, 0
  // Predicated region
  $region14: #{mlp_pallas.1} parent=0 // pred_check
    %p15 = pneg %p14
  $region15: #{mlp_pallas.1} parent=0 // pred_check_branch
    %17 = sbr.rel (%p15) target = $region17
  $region16: #{mlp_pallas.1} parent=0 // pred_region
    %18 = vst [vmem:[#allocation2] sm:$0xff] 0.0
    %19 = vst [vmem:[#allocation2 + $0x8] sm:$0xff] 0.0
  $region17: #{mlp_pallas.1} parent=0 // pred_fallthru
    _
  %v20 = vld [vmem:[%s0] sm:$0xff]
  %v21 = vld [vmem:[%s0 + $0x8] sm:$0xff]
  %v22 = vld [vmem:[%s1] sm:$0xff]
  %v23 = vld [vmem:[%s1 + $0x8] sm:$0xff]
  %v24 = vld [vmem:[%s1 + $0x10] sm:$0xff]
  %v25 = vld [vmem:[%s1 + $0x18] sm:$0xff]
  %v26 = vld [vmem:[%s1 + $0x20] sm:$0xff]
  %v27 = vld [vmem:[%s1 + $0x28] sm:$0xff]
  %v28 = vld [vmem:[%s1 + $0x30] sm:$0xff]
  %v29 = vld [vmem:[%s1 + $0x38] sm:$0xff]
  %v30 = vld [vmem:[%s1 + $0x40] sm:$0xff]
  %v31 = vld [vmem:[%s1 + $0x48] sm:$0xff]
  %v32 = vld [vmem:[%s1 + $0x50] sm:$0xff]
  %v33 = vld [vmem:[%s1 + $0x58] sm:$0xff]
  %v34 = vld [vmem:[%s1 + $0x60] sm:$0xff]
  %v35 = vld [vmem:[%s1 + $0x68] sm:$0xff]
  %v36 = vld [vmem:[%s1 + $0x70] sm:$0xff]
  %v37 = vld [vmem:[%s1 + $0x78] sm:$0xff]
  %v38 = vld [vmem:[%s1 + $0x80] sm:$0xff]
  %v39 = vld [vmem:[%s1 + $0x88] sm:$0xff]
  %v40 = vld [vmem:[%s1 + $0x90] sm:$0xff]
  %v41 = vld [vmem:[%s1 + $0x98] sm:$0xff]
  %v42 = vld [vmem:[%s1 + $0xa0] sm:$0xff]
  %v43 = vld [vmem:[%s1 + $0xa8] sm:$0xff]
  %v44 = vld [vmem:[%s1 + $0xb0] sm:$0xff]
  %v45 = vld [vmem:[%s1 + $0xb8] sm:$0xff]
  %v46 = vld [vmem:[%s1 + $0xc0] sm:$0xff]
  %v47 = vld [vmem:[%s1 + $0xc8] sm:$0xff]
  %v48 = vld [vmem:[%s1 + $0xd0] sm:$0xff]
  %v49 = vld [vmem:[%s1 + $0xd8] sm:$0xff]
  %v50 = vld [vmem:[%s1 + $0xe0] sm:$0xff]
  %v51 = vld [vmem:[%s1 + $0xe8] sm:$0xff]
  %v52 = vld [vmem:[%s1 + $0xf0] sm:$0xff]
  %v53 = vld [vmem:[%s1 + $0xf8] sm:$0xff]
  %54 = vmatprep.subr.mxu0 %v23
  %55 = vmatpush1.msra.mxu0 %v22
  %56 = vmatprep.subr.mxu0 %v25
  %57 = vmatpush1.msra.mxu0 %v24
  %58 = vmatprep.subr.mxu0 %v27
  %59 = vmatpush1.msra.mxu0 %v26
  %60 = vmatprep.subr.mxu0 %v29
  %61 = vmatpush1.msra.mxu0 %v28
  %62 = vmatprep.subr.mxu0 %v31
  %63 = vmatpush1.msra.mxu0 %v30
  %64 = vmatprep.subr.mxu0 %v33
  %65 = vmatpush1.msra.mxu0 %v32
  %66 = vmatprep.subr.mxu0 %v35
  %67 = vmatpush1.msra.mxu0 %v34
  %68 = vmatprep.subr.mxu0 %v37
  %69 = vmatpush1.msra.mxu0 %v36
  %70 = vmatprep.subr.mxu0 %v39
  %71 = vmatpush1.msra.mxu0 %v38
  %72 = vmatprep.subr.mxu0 %v41
  %73 = vmatpush1.msra.mxu0 %v40
  %74 = vmatprep.subr.mxu0 %v43
  %75 = vmatpush1.msra.mxu0 %v42
  %76 = vmatprep.subr.mxu0 %v45
  %77 = vmatpush1.msra.mxu0 %v44
  %78 = vmatprep.subr.mxu0 %v47
  %79 = vmatpush1.msra.mxu0 %v46
  %80 = vmatprep.subr.mxu0 %v49
  %81 = vmatpush1.msra.mxu0 %v48
  %82 = vmatprep.subr.mxu0 %v51
  %83 = vmatpush1.msra.mxu0 %v50
  %84 = vmatprep.subr.mxu0 %v53
  %85 = vmatpush1.msra.mxu0 %v52
  %86 = vmatprep.subr.mxu0 0.0
  %87 = vmatpush1.msra.mxu0 0.0
  %88 = vmatprep.subr.mxu0 0.0
  %89 = vmatpush1.msra.mxu0 0.0
  %90 = vmatprep.subr.mxu0 0.0
  %91 = vmatpush1.msra.mxu0 0.0
  %92 = vmatprep.subr.mxu0 0.0
  %93 = vmatpush1.msra.mxu0 0.0
  %94 = vmatprep.subr.mxu0 0.0
  %95 = vmatpush1.msra.mxu0 0.0
  %96 = vmatprep.subr.mxu0 0.0
  %97 = vmatpush1.msra.mxu0 0.0
  %98 = vmatprep.subr.mxu0 0.0
  %99 = vmatpush1.msra.mxu0 0.0
  %100 = vmatprep.subr.mxu0 0.0
  %101 = vmatpush1.msra.mxu0 0.0
  %102 = vmatprep.subr.mxu0 0.0
  %103 = vmatpush1.msra.mxu0 0.0
  %104 = vmatprep.subr.mxu0 0.0
  %105 = vmatpush1.msra.mxu0 0.0
  %106 = vmatprep.subr.mxu0 0.0
  %107 = vmatpush1.msra.mxu0 0.0
  %108 = vmatprep.subr.mxu0 0.0
  %109 = vmatpush1.msra.mxu0 0.0
  %110 = vmatprep.subr.mxu0 0.0
  %111 = vmatpush1.msra.mxu0 0.0
  %112 = vmatprep.subr.mxu0 0.0
  %113 = vmatpush1.msra.mxu0 0.0
  %114 = vmatprep.subr.mxu0 0.0
  %115 = vmatpush1.msra.mxu0 0.0
  %116 = vmatprep.subr.mxu0 0.0
  %117 = vmatpush1.msra.mxu0 0.0
  %118 = vmatprep.mubr.f32.mxu0 0.0
  %119 = vmatmul.mubr.f32.gmra.mrb[0].mxu0 %v20
  %v120 = vpop.f32.mrb[0].mxu0
  %v121 = vadd.f32 0.0, %v120
  %v122 = vpop.f32.mrb[0].mxu0
  %v123 = vadd.f32 0.0, %v122
  %124 = vmatprep.mubr.f32.mxu0 0.0
  %125 = vmatmul.mubr.f32.gmra.mrb[0].mxu0 %v21
  %v126 = vpop.f32.mrb[0].mxu0
  %v127 = vadd.f32 0.0, %v126
  %v128 = vpop.f32.mrb[0].mxu0
  %v129 = vadd.f32 0.0, %v128
  %130 = vdwg.mxu0
  %v131 = vxor.u32 %v121, 2147483648
  %v132 = vxor.u32 %v127, 2147483648
  %v133 = vmul.f32 %v131, 1.442695
  %v134 = vpow.pop %v133
  %v135 = vmul.f32 %v132, 1.442695
  %v136 = vpow.pop %v135
  %v137 = vadd.f32 %v134, 1.0
  %v138 = vadd.f32 %v136, 1.0
  %v139 = vrcp.pop %v137
  %v140 = vmul.f32 1.0, %v139
  %v141 = vrcp.pop %v138
  %v142 = vmul.f32 1.0, %v141
  %v143 = vmul.f32 %v121, %v140
  %v144 = vmul.f32 %v127, %v142
  %v145 = vmul.f32 %v143, %v123
  %v146 = vmul.f32 %v144, %v129
  %v147 = vld [vmem:[#allocation2] sm:$0xff]
  %v148 = vld [vmem:[#allocation2 + $0x8] sm:$0xff]
  %v149 = vld [vmem:[%s2] sm:$0xff]
  %v150 = vld [vmem:[%s2 + $0x8] sm:$0xff]
  %v151 = vld [vmem:[%s2 + $0x10] sm:$0xff]
  %v152 = vld [vmem:[%s2 + $0x18] sm:$0xff]
  %v153 = vld [vmem:[%s2 + $0x20] sm:$0xff]
  %v154 = vld [vmem:[%s2 + $0x28] sm:$0xff]
  %v155 = vld [vmem:[%s2 + $0x30] sm:$0xff]
  %v156 = vld [vmem:[%s2 + $0x38] sm:$0xff]
  %v157 = vld [vmem:[%s2 + $0x40] sm:$0xff]
  %v158 = vld [vmem:[%s2 + $0x48] sm:$0xff]
  %v159 = vld [vmem:[%s2 + $0x50] sm:$0xff]
  %v160 = vld [vmem:[%s2 + $0x58] sm:$0xff]
  %v161 = vld [vmem:[%s2 + $0x60] sm:$0xff]
  %v162 = vld [vmem:[%s2 + $0x68] sm:$0xff]
  %v163 = vld [vmem:[%s2 + $0x70] sm:$0xff]
  %v164 = vld [vmem:[%s2 + $0x78] sm:$0xff]
  %165 = vmatprep.subr.mxu0 0.0
  %166 = vmatpush1.msra.mxu0 %v149
  %167 = vmatprep.subr.mxu0 0.0
  %168 = vmatpush1.msra.mxu0 %v150
  %169 = vmatprep.subr.mxu0 0.0
  %170 = vmatpush1.msra.mxu0 %v151
  %171 = vmatprep.subr.mxu0 0.0
  %172 = vmatpush1.msra.mxu0 %v152
  %173 = vmatprep.subr.mxu0 0.0
  %174 = vmatpush1.msra.mxu0 %v153
  %175 = vmatprep.subr.mxu0 0.0
  %176 = vmatpush1.msra.mxu0 %v154
  %177 = vmatprep.subr.mxu0 0.0
  %178 = vmatpush1.msra.mxu0 %v155
  %179 = vmatprep.subr.mxu0 0.0
  %180 = vmatpush1.msra.mxu0 %v156
  %181 = vmatprep.subr.mxu0 0.0
  %182 = vmatpush1.msra.mxu0 %v157
  %183 = vmatprep.subr.mxu0 0.0
  %184 = vmatpush1.msra.mxu0 %v158
  %185 = vmatprep.subr.mxu0 0.0
  %186 = vmatpush1.msra.mxu0 %v159
  %187 = vmatprep.subr.mxu0 0.0
  %188 = vmatpush1.msra.mxu0 %v160
  %189 = vmatprep.subr.mxu0 0.0
  %190 = vmatpush1.msra.mxu0 %v161
  %191 = vmatprep.subr.mxu0 0.0
  %192 = vmatpush1.msra.mxu0 %v162
  %193 = vmatprep.subr.mxu0 0.0
  %194 = vmatpush1.msra.mxu0 %v163
  %195 = vmatprep.subr.mxu0 0.0
  %196 = vmatpush1.msra.mxu0 %v164
  %197 = vmatprep.subr.mxu0 0.0
  %198 = vmatpush1.msra.mxu0 0.0
  %199 = vmatprep.subr.mxu0 0.0
  %200 = vmatpush1.msra.mxu0 0.0
  %201 = vmatprep.subr.mxu0 0.0
  %202 = vmatpush1.msra.mxu0 0.0
  %203 = vmatprep.subr.mxu0 0.0
  %204 = vmatpush1.msra.mxu0 0.0
  %205 = vmatprep.subr.mxu0 0.0
  %206 = vmatpush1.msra.mxu0 0.0
  %207 = vmatprep.subr.mxu0 0.0
  %208 = vmatpush1.msra.mxu0 0.0
  %209 = vmatprep.subr.mxu0 0.0
  %210 = vmatpush1.msra.mxu0 0.0
  %211 = vmatprep.subr.mxu0 0.0
  %212 = vmatpush1.msra.mxu0 0.0
  %213 = vmatprep.subr.mxu0 0.0
  %214 = vmatpush1.msra.mxu0 0.0
  %215 = vmatprep.subr.mxu0 0.0
  %216 = vmatpush1.msra.mxu0 0.0
  %217 = vmatprep.subr.mxu0 0.0
  %218 = vmatpush1.msra.mxu0 0.0
  %219 = vmatprep.subr.mxu0 0.0
  %220 = vmatpush1.msra.mxu0 0.0
  %221 = vmatprep.subr.mxu0 0.0
  %222 = vmatpush1.msra.mxu0 0.0
  %223 = vmatprep.subr.mxu0 0.0
  %224 = vmatpush1.msra.mxu0 0.0
  %225 = vmatprep.subr.mxu0 0.0
  %226 = vmatpush1.msra.mxu0 0.0
  %227 = vmatprep.subr.mxu0 0.0
  %228 = vmatpush1.msra.mxu0 0.0
  %229 = vmatprep.mubr.f32.mxu0 0.0
  %230 = vmatmul.mubr.f32.gmra.mrb[0].mxu0 %v145
  %v231 = vpop.f32.mrb[0].mxu0
  %v232 = vadd.f32 0.0, %v231
  %v233 = vpop.f32.mrb[0].mxu0
  %234 = vmatprep.mubr.f32.mxu0 0.0
  %235 = vmatmul.mubr.f32.gmra.mrb[0].mxu0 %v146
  %v236 = vpop.f32.mrb[0].mxu0
  %v237 = vadd.f32 0.0, %v236
  %v238 = vpop.f32.mrb[0].mxu0
  %239 = vdwg.mxu0
  %v240 = vadd.f32 %v147, %v232
  %v241 = vadd.f32 %v148, %v237
  %242 = vst [vmem:[#allocation2] sm:$0xff] %v240
  %243 = vst [vmem:[#allocation2 + $0x8] sm:$0xff] %v241
  // Predicated region
  $region18: #{mlp_pallas.1} parent=0 // pred_check
    %p244 = pneg %p14
  $region19: #{mlp_pallas.1} parent=0 // pred_check_branch
    %246 = sbr.rel (%p244) target = $region21
  $region20: #{mlp_pallas.1} parent=0 // pred_region
    %v247 = vld [vmem:[#allocation2] sm:$0xff]
    %v248 = vld [vmem:[#allocation2 + $0x8] sm:$0xff]
    %249 = vst [vmem:[%s3] sm:$0xff] %v247
    %250 = vst [vmem:[%s3 + $0x8] sm:$0xff] %v248
  $region21: #{mlp_pallas.1} parent=0 // pred_fallthru
    _
  // Predicated region
  $region22: #{mlp_pallas.1} parent=0 // pred_check
    _
  $region23: #{mlp_pallas.1} parent=0 // pred_check_branch
    %252 = sbr.rel (0) target = $region25
  $region24: #{mlp_pallas.1} parent=0 // pred_region
    _
  $region25: #{mlp_pallas.1} parent=0 // pred_fallthru
    _
  // Predicated region
  $region26: #{mlp_pallas.1} parent=0 // pred_check
    _
  $region27: #{mlp_pallas.1} parent=0 // pred_check_branch
    %254 = sbr.rel (0) target = $region29
  $region28: #{mlp_pallas.1} parent=0 // pred_region
    _
  $region29: #{mlp_pallas.1} parent=0 // pred_fallthru
    _

</llo_original>
